<compile_context>
chip_gen: v5e
topology: v5e:2x2
jax: 0.10.0
libtpu: 0.0.40
codegen_flags: <defaults>
</compile_context>

<pallas_src>
import functools

import jax
import jax.numpy as jnp
from jax.experimental import pallas as pl
from jax.experimental.pallas import tpu as pltpu


# ----------------------------------------------------------------------------
# Fused kernel
# ----------------------------------------------------------------------------
def _fault_gat_kernel(x_ref, bias_f_ref, bias_r_ref, bias_ft_ref,
                      w_aug_ref, w_src_t_ref, b_cat_ref,
                      wfc_ref, bfc_ref,
                      wo_ref, aso_ref, ado_ref, bo_ref,
                      o_ref, *, H, C):
    HC = H * C
    x = x_ref[...]                                                # [N, Fin] bf16

    # --- one lane-dense projection for BOTH layer-1 GATs + all alpha_dst ----
    xp = jnp.dot(x, w_aug_ref[...],
                 preferred_element_type=jnp.float32)              # [N, 2HC+2H]
    # --- all alpha_src rows in one tiny rhs-transposed matmul ---------------
    a_src_rows = jax.lax.dot_general(
        w_src_t_ref[...], x, (((1,), (1,)), ((), ())),
        preferred_element_type=jnp.float32)                       # [2H, N]

    biases = (bias_f_ref[...], bias_r_ref[...])                   # additive 0/-1e30

    def head_out(layer, h):
        xh = xp[:, layer * HC + h * C: layer * HC + (h + 1) * C]  # [N, C]
        a_d = xp[:, 2 * HC + layer * H + h:
                    2 * HC + layer * H + h + 1]                   # [N, 1]
        a_s = a_src_rows[layer * H + h: layer * H + h + 1, :]     # [1, N]
        e = a_d + a_s                                             # [N, N]
        e = jnp.maximum(e, 0.2 * e) + biases[layer]               # LeakyReLU + mask
        p = jnp.exp(e - jnp.max(e, axis=1, keepdims=True))        # softmax over src
        att = p * pl.reciprocal(jnp.sum(p, axis=1, keepdims=True), approx=True)
        return jnp.dot(att.astype(jnp.bfloat16), xh.astype(jnp.bfloat16),
                       preferred_element_type=jnp.float32)        # [N, C]

    # TODO(synk): torch.nn.Dropout / GATConv attention dropout are identity in eval.
    heads = [head_out(layer, h) for layer in range(2) for h in range(H)]
    # [h_fwd | h_up] on lanes (2HC = 128 -> exactly one lane width), bias + ReLU.
    h_cat = jnp.maximum(jnp.concatenate(heads, axis=1) + b_cat_ref[...], 0.0)

    # --- fc: single K=2HC matmul + bias + ReLU -------------------------------
    hfc = jnp.maximum(
        jnp.dot(h_cat.astype(jnp.bfloat16), wfc_ref[...],
                preferred_element_type=jnp.float32) + bfc_ref[...], 0.0)   # [N, HID]

    # --- conv_out (heads=1, out=1, concat=False), transposed (src, dst) ------
    wo = wo_ref[...]                                              # [1, HID]
    xh_col = jnp.sum(hfc * wo, axis=1, keepdims=True)             # [N, 1]  (VPU+XLU)
    xh_row = jax.lax.dot_general(wo, hfc, (((1,), (1,)), ((), ())),
                                 preferred_element_type=jnp.float32)  # [1, N]
    eT = xh_col * aso_ref[...] + xh_row * ado_ref[...]            # eT[src, dst]
    eT = jnp.maximum(eT, 0.2 * eT) + bias_ft_ref[...]             # LeakyReLU + mask
    p = jnp.exp(eT - jnp.max(eT, axis=0, keepdims=True))          # softmax over src
    attT = p * pl.reciprocal(jnp.sum(p, axis=0, keepdims=True), approx=True)
    z = jnp.sum(attT * xh_col, axis=0, keepdims=True) + bo_ref[...]   # [1, N]
    o_ref[...] = 0.5 * (jnp.tanh(0.5 * z) + 1.0)                  # sigmoid on EUP


# ----------------------------------------------------------------------------
# Wrapper: host-side weight folding + single fused launch
# ----------------------------------------------------------------------------
def _vmem_spec():
    return pl.BlockSpec(memory_space=pltpu.MemorySpace.VMEM)


def _dense_adj(edge_index, num_nodes):
    """adj[dst, src] = True for edges, plus self-loops (PyG add_self_loops=True)."""
    src, dst = edge_index[0], edge_index[1]
    adj = jnp.zeros((num_nodes, num_nodes), jnp.float32).at[dst, src].max(1.0)
    return jnp.maximum(adj, jnp.eye(num_nodes, dtype=jnp.float32)) > 0


def _bias_mask(edge_index, num_nodes):
    """Additive mask: 0 for edges/self-loops, -1e30 elsewhere (f32)."""
    return jnp.where(_dense_adj(edge_index, num_nodes), 0.0, -1e30).astype(jnp.float32)


def _fold_attn(w, a, H, C):
    """Fold per-head attention vector into the projection: column h = W_h @ a_h."""
    fin = w.shape[0]
    return jnp.einsum("fhc,hc->fh", w.reshape(fin, H, C), a)       # [Fin, H]


def fault_gat_forward(x, edge_index, params):
    """Eval-mode forward of FaultGAT. x: [N, in_dim] float, edge_index: [2, E] int."""
    N = x.shape[0]
    H, C = params["heads"], params["out_per_head"]
    bf16 = jnp.bfloat16
    pf, pu, fc, po = (params["conv_forward"], params["conv_upstream"],
                      params["fc"], params["conv_out"])

    bias_f = _bias_mask(edge_index, N)
    rev_edge_index = jnp.stack([edge_index[1], edge_index[0]], axis=0)
    bias_r = _bias_mask(rev_edge_index, N)
    bias_ft = bias_f.T                                             # conv_out (transposed)

    # Fold a_dst into the projection (extra columns of one big matmul) and
    # a_src into a tiny rhs-transposed mat-vec bank.
    ad_f = _fold_attn(pf["w"], pf["a_dst"], H, C)
    ad_u = _fold_attn(pu["w"], pu["a_dst"], H, C)
    as_f = _fold_attn(pf["w"], pf["a_src"], H, C)
    as_u = _fold_attn(pu["w"], pu["a_src"], H, C)
    w_aug = jnp.concatenate([pf["w"], pu["w"], ad_f, ad_u], axis=1).astype(bf16)
    w_src_t = jnp.concatenate([as_f, as_u], axis=1).T.astype(bf16)  # [2H, Fin]
    b_cat = jnp.concatenate([pf["b"], pu["b"]], axis=1)             # [1, 2HC]

    args = (x.astype(bf16), bias_f, bias_r, bias_ft,
            w_aug, w_src_t, b_cat,
            fc["w"].astype(bf16), fc["b"],
            po["w"].reshape(1, -1),                                 # [1, HID]
            po["a_src"].reshape(1, 1), po["a_dst"].reshape(1, 1),
            po["b"].reshape(1, 1))

    kernel = functools.partial(_fault_gat_kernel, H=H, C=C)
    out_row = pl.pallas_call(
        kernel,
        out_shape=jax.ShapeDtypeStruct((1, N), jnp.float32),        # lane-dense row
        in_specs=[_vmem_spec() for _ in args],
        out_specs=_vmem_spec(),
    )(*args)
    return out_row.reshape(N, 1)


# ----------------------------------------------------------------------------
# Parameters
# ----------------------------------------------------------------------------
def init_params(key, in_dim=4, hidden_dim=64, heads=2):
    c = hidden_dim // heads
    ks = jax.random.split(key, 12)

    def n(k, shape, scale=0.1):
        return (scale * jax.random.normal(k, shape)).astype(jnp.float32)

    return {
        "conv_forward": dict(w=n(ks[0], (in_dim, heads * c)),
                             a_src=n(ks[1], (heads, c)),
                             a_dst=n(ks[2], (heads, c)),
                             b=n(ks[3], (1, heads * c))),
        "conv_upstream": dict(w=n(ks[4], (in_dim, heads * c)),
                              a_src=n(ks[5], (heads, c)),
                              a_dst=n(ks[6], (heads, c)),
                              b=n(ks[7], (1, heads * c))),
        "fc": dict(w=n(ks[8], (2 * hidden_dim, hidden_dim)),
                   b=n(ks[9], (1, hidden_dim))),
        "conv_out": dict(w=n(ks[10], (hidden_dim, 1)),
                         a_src=n(ks[11], (1, 1)),
                         a_dst=n(ks[11], (1, 1)) * 0.5,
                         b=jnp.zeros((1, 1), jnp.float32)),
        "heads": heads,
        "out_per_head": c,
    }


# ----------------------------------------------------------------------------
# Pure-JAX f32 reference (un-folded math) for tolerance checking
# ----------------------------------------------------------------------------
def _reference_forward(x, edge_index, params):
    N = x.shape[0]
    H, C = params["heads"], params["out_per_head"]
    pf, pu, fc, po = (params["conv_forward"], params["conv_upstream"],
                      params["fc"], params["conv_out"])
    adj_f = _dense_adj(edge_index, N)
    rev = jnp.stack([edge_index[1], edge_index[0]], axis=0)
    adj_r = _dense_adj(rev, N)

    def gat(xin, p, adj, heads, c):
        xp = xin @ p["w"]
        outs = []
        for h in range(heads):
            xh = xp[:, h * c:(h + 1) * c]
            a_d = xh @ p["a_dst"][h]
            a_s = xh @ p["a_src"][h]
            e = a_d[:, None] + a_s[None, :]
            e = jnp.where(e > 0, e, 0.2 * e)
            e = jnp.where(adj, e, -jnp.inf)
            att = jax.nn.softmax(e, axis=1)
            outs.append(att @ xh)
        return jnp.concatenate(outs, axis=1) + p["b"]

    h_f = jax.nn.relu(gat(x, pf, adj_f, H, C))
    h_u = jax.nn.relu(gat(x, pu, adj_r, H, C))
    h = jax.nn.relu(jnp.concatenate([h_f, h_u], axis=1) @ fc["w"] + fc["b"])
    z = gat(h, po, adj_f, 1, 1)
    return jax.nn.sigmoid(z)


# ----------------------------------------------------------------------------
if __name__ == "__main__":
    N, IN_DIM, HIDDEN, HEADS = 16, 4, 64, 2

    key = jax.random.PRNGKey(0)
    k_x, k_p = jax.random.split(key)

    x = jax.random.normal(k_x, (N, IN_DIM), dtype=jnp.float32)

    # Deterministic ring-style graph: each node i sends to (i+1)%N and (i+3)%N.
    idx = jnp.arange(N, dtype=jnp.int32)
    src = jnp.concatenate([idx, idx])
    dst = jnp.concatenate([(idx + 1) % N, (idx + 3) % N])
    edge_index = jnp.stack([src, dst], axis=0)                     # [2, 32]

    params = init_params(k_p, IN_DIM, HIDDEN, HEADS)

    out = jax.block_until_ready(fault_gat_forward(x, edge_index, params))
    ref = jax.block_until_ready(_reference_forward(x, edge_index, params))

    assert out.shape == (N, 1)
    assert bool(jnp.all(jnp.isfinite(out)))
    assert bool(jnp.all((out >= 0.0) & (out <= 1.0)))
    assert bool(jnp.allclose(out, ref, atol=5e-2)), \
        float(jnp.max(jnp.abs(out - ref)))
    print("KERNEL_OK")
</pallas_src>

<mosaic_0001>
module attributes {stable_mosaic.version = 11 : i64} {
  func.func @_fault_gat_kernel(%arg0: memref<16x4xbf16, #tpu.memory_space<vmem>>, %arg1: memref<16x16xf32, #tpu.memory_space<vmem>>, %arg2: memref<16x16xf32, #tpu.memory_space<vmem>>, %arg3: memref<16x16xf32, #tpu.memory_space<vmem>>, %arg4: memref<4x132xbf16, #tpu.memory_space<vmem>>, %arg5: memref<4x4xbf16, #tpu.memory_space<vmem>>, %arg6: memref<1x128xf32, #tpu.memory_space<vmem>>, %arg7: memref<128x64xbf16, #tpu.memory_space<vmem>>, %arg8: memref<1x64xf32, #tpu.memory_space<vmem>>, %arg9: memref<1x64xf32, #tpu.memory_space<vmem>>, %arg10: memref<1x1xf32, #tpu.memory_space<vmem>>, %arg11: memref<1x1xf32, #tpu.memory_space<vmem>>, %arg12: memref<1x1xf32, #tpu.memory_space<vmem>>, %arg13: memref<1x16xf32, #tpu.memory_space<vmem>>) attributes {dimension_semantics = [], scalar_prefetch = 0 : i64, scratch_operands = 0 : i64, tpu.core_type = #tpu.core_type<tc>} {
    %c0 = arith.constant 0 : index
    %c0_0 = arith.constant 0 : index
    %0 = vector.load %arg0[%c0, %c0_0] : memref<16x4xbf16, #tpu.memory_space<vmem>>, vector<16x4xbf16>
    %c0_1 = arith.constant 0 : index
    %c0_2 = arith.constant 0 : index
    %1 = vector.load %arg4[%c0_1, %c0_2] : memref<4x132xbf16, #tpu.memory_space<vmem>>, vector<4x132xbf16>
    %cst = arith.constant dense<0.000000e+00> : vector<16x132xf32>
    %2 = tpu.matmul %0, %1, %cst {dimension_numbers = #tpu.dot_dimension_numbers<[1], [0], [0], [1], [0, 0, 1, 1], [], []>} : vector<16x4xbf16>, vector<4x132xbf16>, vector<16x132xf32> -> vector<16x132xf32>
    %c0_3 = arith.constant 0 : index
    %c0_4 = arith.constant 0 : index
    %3 = vector.load %arg5[%c0_3, %c0_4] : memref<4x4xbf16, #tpu.memory_space<vmem>>, vector<4x4xbf16>
    %cst_5 = arith.constant dense<0.000000e+00> : vector<4x16xf32>
    %4 = tpu.matmul %3, %0, %cst_5 {dimension_numbers = #tpu.dot_dimension_numbers<[1], [1], [0], [0], [0, 0, 1, 0], [], []>} : vector<4x4xbf16>, vector<16x4xbf16>, vector<4x16xf32> -> vector<4x16xf32>
    %c0_6 = arith.constant 0 : index
    %c0_7 = arith.constant 0 : index
    %5 = vector.load %arg1[%c0_6, %c0_7] : memref<16x16xf32, #tpu.memory_space<vmem>>, vector<16x16xf32>
    %c0_8 = arith.constant 0 : index
    %c0_9 = arith.constant 0 : index
    %6 = vector.load %arg2[%c0_8, %c0_9] : memref<16x16xf32, #tpu.memory_space<vmem>>, vector<16x16xf32>
    %7 = vector.extract_strided_slice %2 {offsets = [0, 0], sizes = [16, 32], strides = [1, 1]} : vector<16x132xf32> to vector<16x32xf32>
    %8 = vector.extract_strided_slice %2 {offsets = [0, 128], sizes = [16, 1], strides = [1, 1]} : vector<16x132xf32> to vector<16x1xf32>
    %9 = vector.extract_strided_slice %4 {offsets = [0, 0], sizes = [1, 16], strides = [1, 1]} : vector<4x16xf32> to vector<1x16xf32>
    %10 = vector.broadcast %8 : vector<16x1xf32> to vector<16x16xf32>
    %11 = vector.broadcast %9 : vector<1x16xf32> to vector<16x16xf32>
    %12 = arith.addf %10, %11 : vector<16x16xf32>
    %cst_10 = arith.constant 2.000000e-01 : f32
    %13 = vector.broadcast %cst_10 : f32 to vector<16x16xf32>
    %14 = arith.mulf %13, %12 : vector<16x16xf32>
    %15 = arith.maximumf %12, %14 : vector<16x16xf32>
    %16 = arith.addf %15, %5 : vector<16x16xf32>
    %cst_11 = arith.constant dense<0xFF800000> : vector<16xf32>
    %17 = vector.multi_reduction <maximumf>, %16, %cst_11 [1] : vector<16x16xf32> to vector<16xf32>
    %18 = vector.shape_cast %17 : vector<16xf32> to vector<16x1xf32>
    %19 = vector.broadcast %18 : vector<16x1xf32> to vector<16x16xf32>
    %20 = arith.subf %16, %19 : vector<16x16xf32>
    %21 = math.exp %20 : vector<16x16xf32>
    %cst_12 = arith.constant dense<0.000000e+00> : vector<16xf32>
    %22 = vector.multi_reduction <add>, %21, %cst_12 [1] : vector<16x16xf32> to vector<16xf32>
    %23 = vector.shape_cast %22 : vector<16xf32> to vector<16x1xf32>
    %24 = tpu.reciprocal %23 {approx = true} : vector<16x1xf32> -> vector<16x1xf32>
    %25 = vector.broadcast %24 : vector<16x1xf32> to vector<16x16xf32>
    %26 = arith.mulf %21, %25 : vector<16x16xf32>
    %27 = arith.truncf %26 : vector<16x16xf32> to vector<16x16xbf16>
    %28 = arith.truncf %7 : vector<16x32xf32> to vector<16x32xbf16>
    %cst_13 = arith.constant dense<0.000000e+00> : vector<16x32xf32>
    %29 = tpu.matmul %27, %28, %cst_13 {dimension_numbers = #tpu.dot_dimension_numbers<[1], [0], [0], [1], [0, 0, 1, 1], [], []>} : vector<16x16xbf16>, vector<16x32xbf16>, vector<16x32xf32> -> vector<16x32xf32>
    %30 = vector.extract_strided_slice %2 {offsets = [0, 32], sizes = [16, 32], strides = [1, 1]} : vector<16x132xf32> to vector<16x32xf32>
    %31 = vector.extract_strided_slice %2 {offsets = [0, 129], sizes = [16, 1], strides = [1, 1]} : vector<16x132xf32> to vector<16x1xf32>
    %32 = vector.extract_strided_slice %4 {offsets = [1, 0], sizes = [1, 16], strides = [1, 1]} : vector<4x16xf32> to vector<1x16xf32>
    %33 = vector.broadcast %31 : vector<16x1xf32> to vector<16x16xf32>
    %34 = vector.broadcast %32 : vector<1x16xf32> to vector<16x16xf32>
    %35 = arith.addf %33, %34 : vector<16x16xf32>
    %cst_14 = arith.constant 2.000000e-01 : f32
    %36 = vector.broadcast %cst_14 : f32 to vector<16x16xf32>
    %37 = arith.mulf %36, %35 : vector<16x16xf32>
    %38 = arith.maximumf %35, %37 : vector<16x16xf32>
    %39 = arith.addf %38, %5 : vector<16x16xf32>
    %cst_15 = arith.constant dense<0xFF800000> : vector<16xf32>
    %40 = vector.multi_reduction <maximumf>, %39, %cst_15 [1] : vector<16x16xf32> to vector<16xf32>
    %41 = vector.shape_cast %40 : vector<16xf32> to vector<16x1xf32>
    %42 = vector.broadcast %41 : vector<16x1xf32> to vector<16x16xf32>
    %43 = arith.subf %39, %42 : vector<16x16xf32>
    %44 = math.exp %43 : vector<16x16xf32>
    %cst_16 = arith.constant dense<0.000000e+00> : vector<16xf32>
    %45 = vector.multi_reduction <add>, %44, %cst_16 [1] : vector<16x16xf32> to vector<16xf32>
    %46 = vector.shape_cast %45 : vector<16xf32> to vector<16x1xf32>
    %47 = tpu.reciprocal %46 {approx = true} : vector<16x1xf32> -> vector<16x1xf32>
    %48 = vector.broadcast %47 : vector<16x1xf32> to vector<16x16xf32>
    %49 = arith.mulf %44, %48 : vector<16x16xf32>
    %50 = arith.truncf %49 : vector<16x16xf32> to vector<16x16xbf16>
    %51 = arith.truncf %30 : vector<16x32xf32> to vector<16x32xbf16>
    %cst_17 = arith.constant dense<0.000000e+00> : vector<16x32xf32>
    %52 = tpu.matmul %50, %51, %cst_17 {dimension_numbers = #tpu.dot_dimension_numbers<[1], [0], [0], [1], [0, 0, 1, 1], [], []>} : vector<16x16xbf16>, vector<16x32xbf16>, vector<16x32xf32> -> vector<16x32xf32>
    %53 = vector.extract_strided_slice %2 {offsets = [0, 64], sizes = [16, 32], strides = [1, 1]} : vector<16x132xf32> to vector<16x32xf32>
    %54 = vector.extract_strided_slice %2 {offsets = [0, 130], sizes = [16, 1], strides = [1, 1]} : vector<16x132xf32> to vector<16x1xf32>
    %55 = vector.extract_strided_slice %4 {offsets = [2, 0], sizes = [1, 16], strides = [1, 1]} : vector<4x16xf32> to vector<1x16xf32>
    %56 = vector.broadcast %54 : vector<16x1xf32> to vector<16x16xf32>
    %57 = vector.broadcast %55 : vector<1x16xf32> to vector<16x16xf32>
    %58 = arith.addf %56, %57 : vector<16x16xf32>
    %cst_18 = arith.constant 2.000000e-01 : f32
    %59 = vector.broadcast %cst_18 : f32 to vector<16x16xf32>
    %60 = arith.mulf %59, %58 : vector<16x16xf32>
    %61 = arith.maximumf %58, %60 : vector<16x16xf32>
    %62 = arith.addf %61, %6 : vector<16x16xf32>
    %cst_19 = arith.constant dense<0xFF800000> : vector<16xf32>
    %63 = vector.multi_reduction <maximumf>, %62, %cst_19 [1] : vector<16x16xf32> to vector<16xf32>
    %64 = vector.shape_cast %63 : vector<16xf32> to vector<16x1xf32>
    %65 = vector.broadcast %64 : vector<16x1xf32> to vector<16x16xf32>
    %66 = arith.subf %62, %65 : vector<16x16xf32>
    %67 = math.exp %66 : vector<16x16xf32>
    %cst_20 = arith.constant dense<0.000000e+00> : vector<16xf32>
    %68 = vector.multi_reduction <add>, %67, %cst_20 [1] : vector<16x16xf32> to vector<16xf32>
    %69 = vector.shape_cast %68 : vector<16xf32> to vector<16x1xf32>
    %70 = tpu.reciprocal %69 {approx = true} : vector<16x1xf32> -> vector<16x1xf32>
    %71 = vector.broadcast %70 : vector<16x1xf32> to vector<16x16xf32>
    %72 = arith.mulf %67, %71 : vector<16x16xf32>
    %73 = arith.truncf %72 : vector<16x16xf32> to vector<16x16xbf16>
    %74 = arith.truncf %53 : vector<16x32xf32> to vector<16x32xbf16>
    %cst_21 = arith.constant dense<0.000000e+00> : vector<16x32xf32>
    %75 = tpu.matmul %73, %74, %cst_21 {dimension_numbers = #tpu.dot_dimension_numbers<[1], [0], [0], [1], [0, 0, 1, 1], [], []>} : vector<16x16xbf16>, vector<16x32xbf16>, vector<16x32xf32> -> vector<16x32xf32>
    %76 = vector.extract_strided_slice %2 {offsets = [0, 96], sizes = [16, 32], strides = [1, 1]} : vector<16x132xf32> to vector<16x32xf32>
    %77 = vector.extract_strided_slice %2 {offsets = [0, 131], sizes = [16, 1], strides = [1, 1]} : vector<16x132xf32> to vector<16x1xf32>
    %78 = vector.extract_strided_slice %4 {offsets = [3, 0], sizes = [1, 16], strides = [1, 1]} : vector<4x16xf32> to vector<1x16xf32>
    %79 = vector.broadcast %77 : vector<16x1xf32> to vector<16x16xf32>
    %80 = vector.broadcast %78 : vector<1x16xf32> to vector<16x16xf32>
    %81 = arith.addf %79, %80 : vector<16x16xf32>
    %cst_22 = arith.constant 2.000000e-01 : f32
    %82 = vector.broadcast %cst_22 : f32 to vector<16x16xf32>
    %83 = arith.mulf %82, %81 : vector<16x16xf32>
    %84 = arith.maximumf %81, %83 : vector<16x16xf32>
    %85 = arith.addf %84, %6 : vector<16x16xf32>
    %cst_23 = arith.constant dense<0xFF800000> : vector<16xf32>
    %86 = vector.multi_reduction <maximumf>, %85, %cst_23 [1] : vector<16x16xf32> to vector<16xf32>
    %87 = vector.shape_cast %86 : vector<16xf32> to vector<16x1xf32>
    %88 = vector.broadcast %87 : vector<16x1xf32> to vector<16x16xf32>
    %89 = arith.subf %85, %88 : vector<16x16xf32>
    %90 = math.exp %89 : vector<16x16xf32>
    %cst_24 = arith.constant dense<0.000000e+00> : vector<16xf32>
    %91 = vector.multi_reduction <add>, %90, %cst_24 [1] : vector<16x16xf32> to vector<16xf32>
    %92 = vector.shape_cast %91 : vector<16xf32> to vector<16x1xf32>
    %93 = tpu.reciprocal %92 {approx = true} : vector<16x1xf32> -> vector<16x1xf32>
    %94 = vector.broadcast %93 : vector<16x1xf32> to vector<16x16xf32>
    %95 = arith.mulf %90, %94 : vector<16x16xf32>
    %96 = arith.truncf %95 : vector<16x16xf32> to vector<16x16xbf16>
    %97 = arith.truncf %76 : vector<16x32xf32> to vector<16x32xbf16>
    %cst_25 = arith.constant dense<0.000000e+00> : vector<16x32xf32>
    %98 = tpu.matmul %96, %97, %cst_25 {dimension_numbers = #tpu.dot_dimension_numbers<[1], [0], [0], [1], [0, 0, 1, 1], [], []>} : vector<16x16xbf16>, vector<16x32xbf16>, vector<16x32xf32> -> vector<16x32xf32>
    %99 = tpu.concatenate %29, %52, %75, %98 in 1 : vector<16x32xf32>, vector<16x32xf32>, vector<16x32xf32>, vector<16x32xf32> -> vector<16x128xf32>
    %c0_26 = arith.constant 0 : index
    %c0_27 = arith.constant 0 : index
    %100 = vector.load %arg6[%c0_26, %c0_27] : memref<1x128xf32, #tpu.memory_space<vmem>>, vector<1x128xf32>
    %101 = vector.broadcast %100 : vector<1x128xf32> to vector<16x128xf32>
    %102 = arith.addf %99, %101 : vector<16x128xf32>
    %cst_28 = arith.constant 0.000000e+00 : f32
    %103 = vector.broadcast %cst_28 : f32 to vector<16x128xf32>
    %104 = arith.maximumf %102, %103 : vector<16x128xf32>
    %105 = arith.truncf %104 : vector<16x128xf32> to vector<16x128xbf16>
    %c0_29 = arith.constant 0 : index
    %c0_30 = arith.constant 0 : index
    %106 = vector.load %arg7[%c0_29, %c0_30] : memref<128x64xbf16, #tpu.memory_space<vmem>>, vector<128x64xbf16>
    %cst_31 = arith.constant dense<0.000000e+00> : vector<16x64xf32>
    %107 = tpu.matmul %105, %106, %cst_31 {dimension_numbers = #tpu.dot_dimension_numbers<[1], [0], [0], [1], [0, 0, 1, 1], [], []>} : vector<16x128xbf16>, vector<128x64xbf16>, vector<16x64xf32> -> vector<16x64xf32>
    %c0_32 = arith.constant 0 : index
    %c0_33 = arith.constant 0 : index
    %108 = vector.load %arg8[%c0_32, %c0_33] : memref<1x64xf32, #tpu.memory_space<vmem>>, vector<1x64xf32>
    %109 = vector.broadcast %108 : vector<1x64xf32> to vector<16x64xf32>
    %110 = arith.addf %107, %109 : vector<16x64xf32>
    %cst_34 = arith.constant 0.000000e+00 : f32
    %111 = vector.broadcast %cst_34 : f32 to vector<16x64xf32>
    %112 = arith.maximumf %110, %111 : vector<16x64xf32>
    %c0_35 = arith.constant 0 : index
    %c0_36 = arith.constant 0 : index
    %113 = vector.load %arg9[%c0_35, %c0_36] : memref<1x64xf32, #tpu.memory_space<vmem>>, vector<1x64xf32>
    %114 = vector.broadcast %113 : vector<1x64xf32> to vector<16x64xf32>
    %115 = arith.mulf %112, %114 : vector<16x64xf32>
    %cst_37 = arith.constant dense<0.000000e+00> : vector<16xf32>
    %116 = vector.multi_reduction <add>, %115, %cst_37 [1] : vector<16x64xf32> to vector<16xf32>
    %117 = vector.shape_cast %116 : vector<16xf32> to vector<16x1xf32>
    %cst_38 = arith.constant dense<0.000000e+00> : vector<1x16xf32>
    %118 = tpu.matmul %113, %112, %cst_38 {dimension_numbers = #tpu.dot_dimension_numbers<[1], [1], [0], [0], [0, 0, 1, 0], [], []>} : vector<1x64xf32>, vector<16x64xf32>, vector<1x16xf32> -> vector<1x16xf32>
    %c0_39 = arith.constant 0 : index
    %c0_40 = arith.constant 0 : index
    %119 = vector.load %arg10[%c0_39, %c0_40] : memref<1x1xf32, #tpu.memory_space<vmem>>, vector<1x1xf32>
    %120 = vector.broadcast %119 : vector<1x1xf32> to vector<16x1xf32>
    %121 = arith.mulf %117, %120 : vector<16x1xf32>
    %c0_41 = arith.constant 0 : index
    %c0_42 = arith.constant 0 : index
    %122 = vector.load %arg11[%c0_41, %c0_42] : memref<1x1xf32, #tpu.memory_space<vmem>>, vector<1x1xf32>
    %123 = vector.broadcast %122 : vector<1x1xf32> to vector<1x16xf32>
    %124 = arith.mulf %118, %123 : vector<1x16xf32>
    %125 = vector.broadcast %121 : vector<16x1xf32> to vector<16x16xf32>
    %126 = vector.broadcast %124 : vector<1x16xf32> to vector<16x16xf32>
    %127 = arith.addf %125, %126 : vector<16x16xf32>
    %cst_43 = arith.constant 2.000000e-01 : f32
    %128 = vector.broadcast %cst_43 : f32 to vector<16x16xf32>
    %129 = arith.mulf %128, %127 : vector<16x16xf32>
    %130 = arith.maximumf %127, %129 : vector<16x16xf32>
    %c0_44 = arith.constant 0 : index
    %c0_45 = arith.constant 0 : index
    %131 = vector.load %arg3[%c0_44, %c0_45] : memref<16x16xf32, #tpu.memory_space<vmem>>, vector<16x16xf32>
    %132 = arith.addf %130, %131 : vector<16x16xf32>
    %cst_46 = arith.constant dense<0xFF800000> : vector<16xf32>
    %133 = vector.multi_reduction <maximumf>, %132, %cst_46 [0] : vector<16x16xf32> to vector<16xf32>
    %134 = vector.shape_cast %133 : vector<16xf32> to vector<1x16xf32>
    %135 = vector.broadcast %134 : vector<1x16xf32> to vector<16x16xf32>
    %136 = arith.subf %132, %135 : vector<16x16xf32>
    %137 = math.exp %136 : vector<16x16xf32>
    %cst_47 = arith.constant dense<0.000000e+00> : vector<16xf32>
    %138 = vector.multi_reduction <add>, %137, %cst_47 [0] : vector<16x16xf32> to vector<16xf32>
    %139 = vector.shape_cast %138 : vector<16xf32> to vector<1x16xf32>
    %140 = tpu.reciprocal %139 {approx = true} : vector<1x16xf32> -> vector<1x16xf32>
    %141 = vector.broadcast %140 : vector<1x16xf32> to vector<16x16xf32>
    %142 = arith.mulf %137, %141 : vector<16x16xf32>
    %143 = vector.broadcast %117 : vector<16x1xf32> to vector<16x16xf32>
    %144 = arith.mulf %142, %143 : vector<16x16xf32>
    %cst_48 = arith.constant dense<0.000000e+00> : vector<16xf32>
    %145 = vector.multi_reduction <add>, %144, %cst_48 [0] : vector<16x16xf32> to vector<16xf32>
    %146 = vector.shape_cast %145 : vector<16xf32> to vector<1x16xf32>
    %c0_49 = arith.constant 0 : index
    %c0_50 = arith.constant 0 : index
    %147 = vector.load %arg12[%c0_49, %c0_50] : memref<1x1xf32, #tpu.memory_space<vmem>>, vector<1x1xf32>
    %148 = vector.broadcast %147 : vector<1x1xf32> to vector<1x16xf32>
    %149 = arith.addf %146, %148 : vector<1x16xf32>
    %cst_51 = arith.constant 5.000000e-01 : f32
    %150 = vector.broadcast %cst_51 : f32 to vector<1x16xf32>
    %151 = arith.mulf %150, %149 : vector<1x16xf32>
    %152 = math.tanh %151 : vector<1x16xf32>
    %cst_52 = arith.constant 1.000000e+00 : f32
    %153 = vector.broadcast %cst_52 : f32 to vector<1x16xf32>
    %154 = arith.addf %152, %153 : vector<1x16xf32>
    %cst_53 = arith.constant 5.000000e-01 : f32
    %155 = vector.broadcast %cst_53 : f32 to vector<1x16xf32>
    %156 = arith.mulf %155, %154 : vector<1x16xf32>
    %c0_54 = arith.constant 0 : index
    %c0_55 = arith.constant 0 : index
    %157 = vector.load %arg13[%c0_54, %c0_55] : memref<1x16xf32, #tpu.memory_space<vmem>>, vector<1x16xf32>
    tpu.vector_store %arg13[%c0_54, %c0_55], %156 {strides = array<i32>} : memref<1x16xf32, #tpu.memory_space<vmem>>, vector<1x16xf32>,
    return
  }
}

</mosaic_0001>

<llo_original>
// kernel: tpu_custom_call.1
$region0: #{tpu_custom_call.1}
  #allocation0 [shape = 'u32[]', space=smem, size = 0x4, offset = 0x4, fixed_abs, tag = 'smem constant byte address 0x4 - core index']
  #allocation1 [shape = 'u32[72,128]{1,0:T(1,128)}', space=vmem, size = 0x9000, scoped, tag = 'internal scratch']
  #allocation2 [shape = 'f32[1,1]{1,0:T(1,128)S(1)}', space=vmem, size = 0x200, scoped, tag = 'scoped memory for tpu_custom_call.1']
  #allocation3 [shape = 'f32[1,1]{1,0:T(1,128)S(1)}', space=vmem, size = 0x200, scoped, tag = 'scoped memory for tpu_custom_call.1']
  #allocation4 [shape = 'f32[1,1]{1,0:T(1,128)S(1)}', space=vmem, size = 0x200, scoped, tag = 'scoped memory for tpu_custom_call.1']
  %s0 = inlined_call_operand.vmem [shape: bf16[16,4], index: 0, kind: input, shape index: {}]
  %s1 = inlined_call_operand.vmem [shape: f32[16,16], index: 1, kind: input, shape index: {}]
  %s2 = inlined_call_operand.vmem [shape: f32[16,16], index: 2, kind: input, shape index: {}]
  %s3 = inlined_call_operand.vmem [shape: f32[16,16], index: 3, kind: input, shape index: {}]
  %s4 = inlined_call_operand.vmem [shape: bf16[4,132], index: 4, kind: input, shape index: {}]
  %s5 = inlined_call_operand.vmem [shape: bf16[4,4], index: 5, kind: input, shape index: {}]
  %s6 = inlined_call_operand.vmem [shape: f32[1,128], index: 6, kind: input, shape index: {}]
  %s7 = inlined_call_operand.vmem [shape: bf16[128,64], index: 7, kind: input, shape index: {}]
  %s8 = inlined_call_operand.vmem [shape: f32[1,64], index: 8, kind: input, shape index: {}]
  %s9 = inlined_call_operand.vmem [shape: f32[1,64], index: 9, kind: input, shape index: {}]
  %s10 = inlined_call_operand.<no memory space> [shape: f32[1,1], index: 10, kind: input, shape index: {}]
  %s11 = inlined_call_operand.<no memory space> [shape: f32[1,1], index: 11, kind: input, shape index: {}]
  %s12 = inlined_call_operand.<no memory space> [shape: f32[1,1], index: 12, kind: input, shape index: {}]
  %s13 = inlined_call_operand.hbm [shape: f32[1,16], index: 13, kind: output, shape index: {}]
  %s14 = sld [smem:[#allocation0]]
  $region62: #{tpu_custom_call.1} parent=0
    _
  %s16 = ssub.s32 1, %s14
  %s17 = scalar_select 0, %s16, %s14
  %v18 = vstv %s10
  %19 = vst [vmem:[#allocation2] sm:$0x1] %v18
  %v20 = vstv %s11
  %21 = vst [vmem:[#allocation3] sm:$0x1] %v20
  %v22 = vstv %s12
  %23 = vst [vmem:[#allocation4] sm:$0x1] %v22
  $region1: #{tpu_custom_call.1} parent=0
    #allocation5 [shape = 'u8[512]{0}', space=vmem, size = 0x400, scoped, tag = 'output window, operand 0, single buffered']
    #allocation6 [shape = 's32[1]{0}', space=sflag, size = 0x4, scoped, tag = 'scoped memory for tpu_custom_call.1']
    %24 = vsyncpa [#allocation6], 0
    // Predicated region
    $region2: #{tpu_custom_call.1} parent=1 // pred_check
      _
    $region3: #{tpu_custom_call.1} parent=1 // pred_check_branch
      %26 = sbr.rel (0) target = $region5
    $region4: #{tpu_custom_call.1} parent=1 // pred_region
      _
    $region5: #{tpu_custom_call.1} parent=1 // pred_fallthru
      _
    // Predicated region
    $region6: #{tpu_custom_call.1} parent=1 // pred_check
      _
    $region7: #{tpu_custom_call.1} parent=1 // pred_check_branch
      %28 = sbr.rel (0) target = $region9
    $region8: #{tpu_custom_call.1} parent=1 // pred_region
      _
    $region9: #{tpu_custom_call.1} parent=1 // pred_fallthru
      _
    // Predicated region
    $region10: #{tpu_custom_call.1} parent=1 // pred_check
      _
    $region11: #{tpu_custom_call.1} parent=1 // pred_check_branch
      %30 = sbr.rel (0) target = $region13
    $region12: #{tpu_custom_call.1} parent=1 // pred_region
      _
    $region13: #{tpu_custom_call.1} parent=1 // pred_fallthru
      _
    // Predicated region
    $region14: #{tpu_custom_call.1} parent=1 // pred_check
      _
    $region15: #{tpu_custom_call.1} parent=1 // pred_check_branch
      %32 = sbr.rel (0) target = $region17
    $region16: #{tpu_custom_call.1} parent=1 // pred_region
      _
    $region17: #{tpu_custom_call.1} parent=1 // pred_fallthru
      _
    // Predicated region
    $region18: #{tpu_custom_call.1} parent=1 // pred_check
      _
    $region19: #{tpu_custom_call.1} parent=1 // pred_check_branch
      %34 = sbr.rel (0) target = $region21
    $region20: #{tpu_custom_call.1} parent=1 // pred_region
      _
    $region21: #{tpu_custom_call.1} parent=1 // pred_fallthru
      _
    // Predicated region
    $region22: #{tpu_custom_call.1} parent=1 // pred_check
      _
    $region23: #{tpu_custom_call.1} parent=1 // pred_check_branch
      %36 = sbr.rel (0) target = $region25
    $region24: #{tpu_custom_call.1} parent=1 // pred_region
      _
    $region25: #{tpu_custom_call.1} parent=1 // pred_fallthru
      _
    // Predicated region
    $region26: #{tpu_custom_call.1} parent=1 // pred_check
      _
    $region27: #{tpu_custom_call.1} parent=1 // pred_check_branch
      %38 = sbr.rel (0) target = $region29
    $region28: #{tpu_custom_call.1} parent=1 // pred_region
      _
    $region29: #{tpu_custom_call.1} parent=1 // pred_fallthru
      _
    // Predicated region
    $region30: #{tpu_custom_call.1} parent=1 // pred_check
      _
    $region31: #{tpu_custom_call.1} parent=1 // pred_check_branch
      %40 = sbr.rel (0) target = $region33
    $region32: #{tpu_custom_call.1} parent=1 // pred_region
      _
    $region33: #{tpu_custom_call.1} parent=1 // pred_fallthru
      _
    // Predicated region
    $region34: #{tpu_custom_call.1} parent=1 // pred_check
      _
    $region35: #{tpu_custom_call.1} parent=1 // pred_check_branch
      %42 = sbr.rel (0) target = $region37
    $region36: #{tpu_custom_call.1} parent=1 // pred_region
      _
    $region37: #{tpu_custom_call.1} parent=1 // pred_fallthru
      _
    // Predicated region
    $region38: #{tpu_custom_call.1} parent=1 // pred_check
      _
    $region39: #{tpu_custom_call.1} parent=1 // pred_check_branch
      %44 = sbr.rel (0) target = $region41
    $region40: #{tpu_custom_call.1} parent=1 // pred_region
      _
    $region41: #{tpu_custom_call.1} parent=1 // pred_fallthru
      _
    // Predicated region
    $region42: #{tpu_custom_call.1} parent=1 // pred_check
      _
    $region43: #{tpu_custom_call.1} parent=1 // pred_check_branch
      %46 = sbr.rel (0) target = $region45
    $region44: #{tpu_custom_call.1} parent=1 // pred_region
      _
    $region45: #{tpu_custom_call.1} parent=1 // pred_fallthru
      _
    // Predicated region
    $region46: #{tpu_custom_call.1} parent=1 // pred_check
      _
    $region47: #{tpu_custom_call.1} parent=1 // pred_check_branch
      %48 = sbr.rel (0) target = $region49
    $region48: #{tpu_custom_call.1} parent=1 // pred_region
      _
    $region49: #{tpu_custom_call.1} parent=1 // pred_fallthru
      _
    // Predicated region
    $region50: #{tpu_custom_call.1} parent=1 // pred_check
      _
    $region51: #{tpu_custom_call.1} parent=1 // pred_check_branch
      %50 = sbr.rel (0) target = $region53
    $region52: #{tpu_custom_call.1} parent=1 // pred_region
      _
    $region53: #{tpu_custom_call.1} parent=1 // pred_fallthru
      _
    %v52 = vld [vmem:[%s0] sm:$0xf]
    %v53 = vld [vmem:[%s0 + $0x4] sm:$0xf]
    %v54 = vld [vmem:[%s4] sm:$0xf]
    %v57 = vunpack.c.l.b16 %v52
    %v58 = vunpack.c.l.b16 %v53
    %v59 = vpack.c.b16 %v58, %v57
    %61 = vst [vmem:[#allocation1] ss:$4 sm:$0xff] %v54
    %v62 = vld.sshfl [vmem:[#allocation1] sm:$0xff pattern:$0x73625140]
    %v63 = vld.sshfl [vmem:[#allocation1 + $0x8] sm:$0xff pattern:$0x73625140]
    %vm64 = vcmask 31744
    %v66 = vsel %vm64, %v59, 0
    %vm68 = vcmask 1041408
    %v69 = vsel %vm68, %v62, 0
    %v71 = vsel %vm68, %v63, 0
    %73 = vmatpush.bf16.msra.mxu0 0
    %74 = vmatpush.bf16.msra.mxu0 0
    %75 = vmatpush.bf16.msra.mxu0 0
    %76 = vmatpush.bf16.msra.mxu0 0
    %77 = vmatpush.bf16.msra.mxu0 0
    %78 = vmatpush.bf16.msra.mxu0 0
    %79 = vmatpush.bf16.msra.mxu0 0
    %80 = vmatpush.bf16.msra.mxu0 %v69
    %81 = vmatmul.bf16.gmra.mxu0 %v66
    %v82 = vpop.f32.mrf.mxu0
    %v83 = vadd.f32 0.0, %v82
    %v84 = vpop.f32.mrf.mxu0
    %v85 = vadd.f32 0.0, %v84
    %86 = vdwg.mxu0
    %87 = vmatpush.bf16.msra.mxu0 0
    %88 = vmatpush.bf16.msra.mxu0 0
    %89 = vmatpush.bf16.msra.mxu0 0
    %90 = vmatpush.bf16.msra.mxu0 0
    %91 = vmatpush.bf16.msra.mxu0 0
    %92 = vmatpush.bf16.msra.mxu0 0
    %93 = vmatpush.bf16.msra.mxu0 0
    %94 = vmatpush.bf16.msra.mxu0 %v71
    %95 = vmatmul.bf16.gmra.mxu0 %v66
    %v96 = vpop.f32.mrf.mxu0
    %v97 = vadd.f32 0.0, %v96
    %v98 = vpop.f32.mrf.mxu0
    %v99 = vadd.f32 0.0, %v98
    %100 = vdwg.mxu0
    %v101 = vld [vmem:[%s5] sm:$0x3]
    %v103 = vsel %vm64, %v101, 0
    %105 = vmatpush.bf16.xpose.msra.mxu0 0
    %106 = vmatpush.bf16.xpose.msra.mxu0 0
    %107 = vmatpush.bf16.xpose.msra.mxu0 0
    %108 = vmatpush.bf16.xpose.msra.mxu0 0
    %109 = vmatpush.bf16.xpose.msra.mxu0 0
    %110 = vmatpush.bf16.xpose.msra.mxu0 0
    %111 = vmatpush.bf16.xpose.msra.mxu0 0
    %112 = vmatpush.bf16.xpose.msra.mxu0 %v66
    %113 = vmatmul.bf16.gmra.mxu0 %v103
    %v114 = vpop.f32.mrf.mxu0
    %v115 = vadd.f32 0.0, %v114
    %v116 = vpop.f32.mrf.mxu0
    %117 = vdwg.mxu0
    %v118 = vld [vmem:[%s1] sm:$0xff]
    %v119 = vld [vmem:[%s1 + $0x8] sm:$0xff]
    %v120 = vld [vmem:[%s2] sm:$0xff]
    %v121 = vld [vmem:[%s2 + $0x8] sm:$0xff]
    %123 = vset.pattern.permute.xlu0 0
    %124 = vperm.xlu0 %123, %v97
    %v125 = vpop.permute.xlu0 %124
    %128 = vset.pattern.permute.xlu0 0
    %129 = vperm.xlu0 %128, %v99
    %v130 = vpop.permute.xlu0 %129
    %v132 = vperm.slane %v115, 0
    %v133 = vadd.f32 %v125, %v132
    %v134 = vadd.f32 %v130, %v132
    %v135 = vmul.f32 %v133, 0.2
    %v136 = vmul.f32 %v134, 0.2
    %v137 = vmax.f32 %v133, %v135
    %v138 = vmax.f32 %v134, %v136
    %v139 = vadd.f32 %v137, %v118
    %v140 = vadd.f32 %v138, %v119
    %vm141 = vcmask 130048
    %v142 = vsel %vm141, %v139, -inf
    %143 = vmax.xlane.f32.xlu0 %v142
    %v144 = vpop.xlane.xlu0 %143
    %v145 = vsel %vm141, %v140, -inf
    %146 = vmax.xlane.f32.xlu0 %v145
    %v147 = vpop.xlane.xlu0 %146
    %v148 = vsub.f32 %v139, %v144
    %v149 = vsub.f32 %v140, %v147
    %v150 = vmul.f32 %v148, 1.442695
    %v151 = vpow.pop %v150
    %v152 = vmul.f32 %v149, 1.442695
    %v153 = vpow.pop %v152
    %v154 = vsel %vm141, %v151, 0.0
    %155 = vadd.xlane.f32.xlu0 %v154
    %v156 = vpop.xlane.xlu0 %155
    %v157 = vsel %vm141, %v153, 0.0
    %158 = vadd.xlane.f32.xlu0 %v157
    %v159 = vpop.xlane.xlu0 %158
    %v160 = vrcp.pop %v156
    %v161 = vrcp.pop %v159
    %v162 = vmul.f32 %v151, %v160
    %v163 = vmul.f32 %v153, %v161
    %v164 = vpack.c.bf16 %v163, %v162
    %v165 = vpack.c.bf16 %v85, %v83
    %v167 = vsel %vm141, %v164, 0
    %169 = vmatpush.bf16.msra.mxu0 0
    %170 = vmatpush.bf16.msra.mxu0 0
    %171 = vmatpush.bf16.msra.mxu0 0
    %172 = vmatpush.bf16.msra.mxu0 0
    %173 = vmatpush.bf16.msra.mxu0 0
    %174 = vmatpush.bf16.msra.mxu0 0
    %175 = vmatpush.bf16.msra.mxu0 0
    %176 = vmatpush.bf16.msra.mxu0 %v165
    %177 = vmatmul.bf16.gmra.mxu0 %v167
    %v178 = vpop.f32.mrf.mxu0
    %v179 = vadd.f32 0.0, %v178
    %v180 = vpop.f32.mrf.mxu0
    %v181 = vadd.f32 0.0, %v180
    %182 = vdwg.mxu0
    %183 = vset.pattern.permute.xlu0 1
    %184 = vperm.xlu0 %183, %v97
    %v185 = vpop.permute.xlu0 %184
    %187 = vset.pattern.permute.xlu0 1
    %188 = vperm.xlu0 %187, %v99
    %v189 = vpop.permute.xlu0 %188
    %v191 = vperm.slane %v115, 1
    %v192 = vadd.f32 %v185, %v191
    %v193 = vadd.f32 %v189, %v191
    %v194 = vmul.f32 %v192, 0.2
    %v195 = vmul.f32 %v193, 0.2
    %v196 = vmax.f32 %v192, %v194
    %v197 = vmax.f32 %v193, %v195
    %v198 = vadd.f32 %v196, %v118
    %v199 = vadd.f32 %v197, %v119
    %v200 = vsel %vm141, %v198, -inf
    %201 = vmax.xlane.f32.xlu0 %v200
    %v202 = vpop.xlane.xlu0 %201
    %v203 = vsel %vm141, %v199, -inf
    %204 = vmax.xlane.f32.xlu0 %v203
    %v205 = vpop.xlane.xlu0 %204
    %v206 = vsub.f32 %v198, %v202
    %v207 = vsub.f32 %v199, %v205
    %v208 = vmul.f32 %v206, 1.442695
    %v209 = vpow.pop %v208
    %v210 = vmul.f32 %v207, 1.442695
    %v211 = vpow.pop %v210
    %v212 = vsel %vm141, %v209, 0.0
    %213 = vadd.xlane.f32.xlu0 %v212
    %v214 = vpop.xlane.xlu0 %213
    %v215 = vsel %vm141, %v211, 0.0
    %216 = vadd.xlane.f32.xlu0 %v215
    %v217 = vpop.xlane.xlu0 %216
    %v218 = vrcp.pop %v214
    %v219 = vrcp.pop %v217
    %v220 = vmul.f32 %v209, %v218
    %v221 = vmul.f32 %v211, %v219
    %v222 = vpack.c.bf16 %v221, %v220
    %224 = vrot.lane.b32.xlu0 %v165, 96
    %v225 = vpop.permute.xlu0 %224
    %v228 = vsel %vm141, %v222, 0
    %230 = vmatpush.bf16.msra.mxu0 0
    %231 = vmatpush.bf16.msra.mxu0 0
    %232 = vmatpush.bf16.msra.mxu0 0
    %233 = vmatpush.bf16.msra.mxu0 0
    %234 = vmatpush.bf16.msra.mxu0 0
    %235 = vmatpush.bf16.msra.mxu0 0
    %236 = vmatpush.bf16.msra.mxu0 0
    %237 = vmatpush.bf16.msra.mxu0 %v225
    %238 = vmatmul.bf16.gmra.mxu0 %v228
    %v239 = vpop.f32.mrf.mxu0
    %v240 = vadd.f32 0.0, %v239
    %v241 = vpop.f32.mrf.mxu0
    %v242 = vadd.f32 0.0, %v241
    %243 = vdwg.mxu0
    %244 = vset.pattern.permute.xlu0 2
    %245 = vperm.xlu0 %244, %v97
    %v246 = vpop.permute.xlu0 %245
    %248 = vset.pattern.permute.xlu0 2
    %249 = vperm.xlu0 %248, %v99
    %v250 = vpop.permute.xlu0 %249
    %v252 = vperm.slane %v115, 2
    %v253 = vadd.f32 %v246, %v252
    %v254 = vadd.f32 %v250, %v252
    %v255 = vmul.f32 %v253, 0.2
    %v256 = vmul.f32 %v254, 0.2
    %v257 = vmax.f32 %v253, %v255
    %v258 = vmax.f32 %v254, %v256
    %v259 = vadd.f32 %v257, %v120
    %v260 = vadd.f32 %v258, %v121
    %v261 = vsel %vm141, %v259, -inf
    %262 = vmax.xlane.f32.xlu0 %v261
    %v263 = vpop.xlane.xlu0 %262
    %v264 = vsel %vm141, %v260, -inf
    %265 = vmax.xlane.f32.xlu0 %v264
    %v266 = vpop.xlane.xlu0 %265
    %v267 = vsub.f32 %v259, %v263
    %v268 = vsub.f32 %v260, %v266
    %v269 = vmul.f32 %v267, 1.442695
    %v270 = vpow.pop %v269
    %v271 = vmul.f32 %v268, 1.442695
    %v272 = vpow.pop %v271
    %v273 = vsel %vm141, %v270, 0.0
    %274 = vadd.xlane.f32.xlu0 %v273
    %v275 = vpop.xlane.xlu0 %274
    %v276 = vsel %vm141, %v272, 0.0
    %277 = vadd.xlane.f32.xlu0 %v276
    %v278 = vpop.xlane.xlu0 %277
    %v279 = vrcp.pop %v275
    %v280 = vrcp.pop %v278
    %v281 = vmul.f32 %v270, %v279
    %v282 = vmul.f32 %v272, %v280
    %v283 = vpack.c.bf16 %v282, %v281
    %284 = vrot.lane.b32.xlu0 %v165, 64
    %v285 = vpop.permute.xlu0 %284
    %v288 = vsel %vm141, %v283, 0
    %290 = vmatpush.bf16.msra.mxu0 0
    %291 = vmatpush.bf16.msra.mxu0 0
    %292 = vmatpush.bf16.msra.mxu0 0
    %293 = vmatpush.bf16.msra.mxu0 0
    %294 = vmatpush.bf16.msra.mxu0 0
    %295 = vmatpush.bf16.msra.mxu0 0
    %296 = vmatpush.bf16.msra.mxu0 0
    %297 = vmatpush.bf16.msra.mxu0 %v285
    %298 = vmatmul.bf16.gmra.mxu0 %v288
    %v299 = vpop.f32.mrf.mxu0
    %v300 = vadd.f32 0.0, %v299
    %v301 = vpop.f32.mrf.mxu0
    %v302 = vadd.f32 0.0, %v301
    %303 = vdwg.mxu0
    %304 = vset.pattern.permute.xlu0 3
    %305 = vperm.xlu0 %304, %v97
    %v306 = vpop.permute.xlu0 %305
    %308 = vset.pattern.permute.xlu0 3
    %309 = vperm.xlu0 %308, %v99
    %v310 = vpop.permute.xlu0 %309
    %v312 = vperm.slane %v115, 3
    %v313 = vadd.f32 %v306, %v312
    %v314 = vadd.f32 %v310, %v312
    %v315 = vmul.f32 %v313, 0.2
    %v316 = vmul.f32 %v314, 0.2
    %v317 = vmax.f32 %v313, %v315
    %v318 = vmax.f32 %v314, %v316
    %v319 = vadd.f32 %v317, %v120
    %v320 = vadd.f32 %v318, %v121
    %v321 = vsel %vm141, %v319, -inf
    %322 = vmax.xlane.f32.xlu0 %v321
    %v323 = vpop.xlane.xlu0 %322
    %v324 = vsel %vm141, %v320, -inf
    %325 = vmax.xlane.f32.xlu0 %v324
    %v326 = vpop.xlane.xlu0 %325
    %v327 = vsub.f32 %v319, %v323
    %v328 = vsub.f32 %v320, %v326
    %v329 = vmul.f32 %v327, 1.442695
    %v330 = vpow.pop %v329
    %v331 = vmul.f32 %v328, 1.442695
    %v332 = vpow.pop %v331
    %v333 = vsel %vm141, %v330, 0.0
    %334 = vadd.xlane.f32.xlu0 %v333
    %v335 = vpop.xlane.xlu0 %334
    %v336 = vsel %vm141, %v332, 0.0
    %337 = vadd.xlane.f32.xlu0 %v336
    %v338 = vpop.xlane.xlu0 %337
    %v339 = vrcp.pop %v335
    %v340 = vrcp.pop %v338
    %v341 = vmul.f32 %v330, %v339
    %v342 = vmul.f32 %v332, %v340
    %v343 = vpack.c.bf16 %v342, %v341
    %344 = vrot.lane.b32.xlu0 %v165, 32
    %v345 = vpop.permute.xlu0 %344
    %v348 = vsel %vm141, %v343, 0
    %350 = vmatpush.bf16.msra.mxu0 0
    %351 = vmatpush.bf16.msra.mxu0 0
    %352 = vmatpush.bf16.msra.mxu0 0
    %353 = vmatpush.bf16.msra.mxu0 0
    %354 = vmatpush.bf16.msra.mxu0 0
    %355 = vmatpush.bf16.msra.mxu0 0
    %356 = vmatpush.bf16.msra.mxu0 0
    %357 = vmatpush.bf16.msra.mxu0 %v345
    %358 = vmatmul.bf16.gmra.mxu0 %v348
    %v359 = vpop.f32.mrf.mxu0
    %v360 = vadd.f32 0.0, %v359
    %v361 = vpop.f32.mrf.mxu0
    %v362 = vadd.f32 0.0, %v361
    %363 = vdwg.mxu0
    %366 = vrot.lane.b32.xlu0 %v240, 32
    %v367 = vpop.permute.xlu0 %366
    %368 = vrot.lane.b32.xlu0 %v242, 32
    %v369 = vpop.permute.xlu0 %368
    %374 = vrot.lane.b32.xlu0 %v300, 64
    %v375 = vpop.permute.xlu0 %374
    %376 = vrot.lane.b32.xlu0 %v302, 64
    %v377 = vpop.permute.xlu0 %376
    %382 = vrot.lane.b32.xlu0 %v360, 96
    %v383 = vpop.permute.xlu0 %382
    %384 = vrot.lane.b32.xlu0 %v362, 96
    %v385 = vpop.permute.xlu0 %384
    %vm388 = vcmask 261120
    %v389 = vsel %vm388, %v179, %v367
    %v390 = vsel %vm388, %v181, %v369
    %vm391 = vcmask 523264
    %v392 = vsel %vm391, %v389, %v375
    %v393 = vsel %vm391, %v390, %v377
    %vm394 = vcmask 785408
    %v395 = vsel %vm394, %v392, %v383
    %v396 = vsel %vm394, %v393, %v385
    %v397 = vld [vmem:[%s6] sm:$0x1]
    %v399 = vperm.slane %v397, 0
    %v401 = vadd.f32 %v395, %v399
    %v402 = vadd.f32 %v396, %v399
    %v403 = vmax.f32 %v401, 0.0
    %v404 = vmax.f32 %v402, 0.0
    %v405 = vpack.c.bf16 %v404, %v403
    %v406 = vld [vmem:[%s7] sm:$0xf]
    %v407 = vld [vmem:[%s7 + $0x4] sm:$0xf]
    %v408 = vld [vmem:[%s7 + $0x8] sm:$0xf]
    %v409 = vld [vmem:[%s7 + $0xc] sm:$0xf]
    %v410 = vld [vmem:[%s7 + $0x10] sm:$0xf]
    %v411 = vld [vmem:[%s7 + $0x14] sm:$0xf]
    %v412 = vld [vmem:[%s7 + $0x18] sm:$0xf]
    %v413 = vld [vmem:[%s7 + $0x1c] sm:$0xf]
    %v414 = vld [vmem:[%s7 + $0x20] sm:$0xf]
    %v415 = vld [vmem:[%s7 + $0x24] sm:$0xf]
    %v416 = vld [vmem:[%s7 + $0x28] sm:$0xf]
    %v417 = vld [vmem:[%s7 + $0x2c] sm:$0xf]
    %v418 = vld [vmem:[%s7 + $0x30] sm:$0xf]
    %v419 = vld [vmem:[%s7 + $0x34] sm:$0xf]
    %v420 = vld [vmem:[%s7 + $0x38] sm:$0xf]
    %v421 = vld [vmem:[%s7 + $0x3c] sm:$0xf]
    %v422 = vld [vmem:[%s8] sm:$0x1]
    %v424 = vperm.slane %v422, 0
    %v442 = vunpack.c.l.b16 %v406
    %v443 = vunpack.c.l.b16 %v407
    %v444 = vunpack.c.l.b16 %v408
    %v445 = vunpack.c.l.b16 %v409
    %v446 = vunpack.c.l.b16 %v410
    %v447 = vunpack.c.l.b16 %v411
    %v448 = vunpack.c.l.b16 %v412
    %v449 = vunpack.c.l.b16 %v413
    %v450 = vunpack.c.l.b16 %v414
    %v451 = vunpack.c.l.b16 %v415
    %v452 = vunpack.c.l.b16 %v416
    %v453 = vunpack.c.l.b16 %v417
    %v454 = vunpack.c.l.b16 %v418
    %v455 = vunpack.c.l.b16 %v419
    %v456 = vunpack.c.l.b16 %v420
    %v457 = vunpack.c.l.b16 %v421
    %v458 = vpack.c.b16 %v443, %v442
    %v459 = vpack.c.b16 %v445, %v444
    %v460 = vpack.c.b16 %v447, %v446
    %v461 = vpack.c.b16 %v449, %v448
    %v462 = vpack.c.b16 %v451, %v450
    %v463 = vpack.c.b16 %v453, %v452
    %v464 = vpack.c.b16 %v455, %v454
    %v465 = vpack.c.b16 %v457, %v456
    %474 = vmatpush.bf16.msra.mxu0 %v465
    %475 = vmatpush.bf16.msra.mxu0 %v464
    %476 = vmatpush.bf16.msra.mxu0 %v463
    %477 = vmatpush.bf16.msra.mxu0 %v462
    %478 = vmatpush.bf16.msra.mxu0 %v461
    %479 = vmatpush.bf16.msra.mxu0 %v460
    %480 = vmatpush.bf16.msra.mxu0 %v459
    %481 = vmatpush.bf16.msra.mxu0 %v458
    %482 = vmatmul.bf16.gmra.mxu0 %v405
    %v483 = vpop.f32.mrf.mxu0
    %v484 = vadd.f32 %v424, %v483
    %v485 = vpop.f32.mrf.mxu0
    %v486 = vadd.f32 %v424, %v485
    %487 = vdwg.mxu0
    %v488 = vmax.f32 %v484, 0.0
    %v489 = vmax.f32 %v486, 0.0
    %v490 = vld [vmem:[%s9] sm:$0x1]
    %v492 = vperm.slane %v490, 0
    %v494 = vmul.f32 %v488, %v492
    %v495 = vmul.f32 %v489, %v492
    %v496 = vsel %vm391, %v494, 0.0
    %497 = vadd.xlane.f32.xlu0 %v496
    %v498 = vpop.xlane.xlu0 %497
    %v499 = vsel %vm391, %v495, 0.0
    %500 = vadd.xlane.f32.xlu0 %v499
    %v501 = vpop.xlane.xlu0 %500
    %v502 = vsel %vm391, %v490, 0
    %v505 = vsel %vm391, %v488, 0
    %v508 = vsel %vm391, %v489, 0
    %510 = vmatpush.xpose.msra.mxu0 0.0
    %511 = vmatpush.xpose.msra.mxu0 0.0
    %512 = vmatpush.xpose.msra.mxu0 0.0
    %513 = vmatpush.xpose.msra.mxu0 0.0
    %514 = vmatpush.xpose.msra.mxu0 0.0
    %515 = vmatpush.xpose.msra.mxu0 0.0
    %516 = vmatpush.xpose.msra.mxu0 0.0
    %517 = vmatpush.xpose.msra.mxu0 0.0
    %518 = vmatpush.xpose.msra.mxu0 0.0
    %519 = vmatpush.xpose.msra.mxu0 0.0
    %520 = vmatpush.xpose.msra.mxu0 0.0
    %521 = vmatpush.xpose.msra.mxu0 0.0
    %522 = vmatpush.xpose.msra.mxu0 0.0
    %523 = vmatpush.xpose.msra.mxu0 0.0
    %524 = vmatpush.xpose.msra.mxu0 %v508
    %525 = vmatpush.xpose.msra.mxu0 %v505
    %526 = vmatmul.f32.gmra.mxu0 %v502
    %v527 = vpop.f32.mrf.mxu0
    %v528 = vadd.f32 0.0, %v527
    %529 = vdwg.mxu0
    %v530 = vld [vmem:[#allocation2] sm:$0x1]
    %v532 = vperm.slane %v530, 0
    %v534 = vmul.f32 %v498, %v532
    %v535 = vmul.f32 %v501, %v532
    %v536 = vld [vmem:[#allocation3] sm:$0x1]
    %538 = vset.pattern.permute.xlu0 0
    %539 = vperm.xlu0 %538, %v536
    %v540 = vpop.permute.xlu0 %539
    %v542 = vperm.slane %v540, 0
    %v543 = vmul.f32 %v528, %v542
    %545 = vset.pattern.permute.xlu0 0
    %546 = vperm.xlu0 %545, %v534
    %v547 = vpop.permute.xlu0 %546
    %550 = vset.pattern.permute.xlu0 0
    %551 = vperm.xlu0 %550, %v535
    %v552 = vpop.permute.xlu0 %551
    %v554 = vperm.slane %v543, 0
    %v555 = vadd.f32 %v547, %v554
    %v556 = vadd.f32 %v552, %v554
    %v557 = vmul.f32 %v555, 0.2
    %v558 = vmul.f32 %v556, 0.2
    %v559 = vmax.f32 %v555, %v557
    %v560 = vmax.f32 %v556, %v558
    %v561 = vld [vmem:[%s3] sm:$0xff]
    %v562 = vld [vmem:[%s3 + $0x8] sm:$0xff]
    %v563 = vadd.f32 %v559, %v561
    %v564 = vadd.f32 %v560, %v562
    %v565 = vsel %vm141, %v563, -inf
    %v566 = vsel %vm141, %v564, -inf
    %v567 = vmax.f32 %v565, %v566
    %v568 = vrot.slane %v567, 4
    %v569 = vmax.f32 %v567, %v568
    %v570 = vrot.slane %v569, 2
    %v571 = vmax.f32 %v569, %v570
    %v572 = vrot.slane %v571, 1
    %v573 = vmax.f32 %v571, %v572
    %v574 = vsub.f32 %v563, %v573
    %v575 = vsub.f32 %v564, %v573
    %v576 = vmul.f32 %v574, 1.442695
    %v577 = vpow.pop %v576
    %v578 = vmul.f32 %v575, 1.442695
    %v579 = vpow.pop %v578
    %v580 = vsel %vm141, %v577, 0.0
    %v581 = vsel %vm141, %v579, 0.0
    %v582 = vadd.f32 %v580, %v581
    %v583 = vrot.slane %v582, 4
    %v584 = vadd.f32 %v582, %v583
    %v585 = vrot.slane %v584, 2
    %v586 = vadd.f32 %v584, %v585
    %v587 = vrot.slane %v586, 1
    %v588 = vadd.f32 %v586, %v587
    %v589 = vrcp.pop %v588
    %v590 = vmul.f32 %v577, %v589
    %v591 = vmul.f32 %v579, %v589
    %v592 = vmul.f32 %v590, %v498
    %v593 = vmul.f32 %v591, %v501
    %v594 = vsel %vm141, %v592, 0.0
    %v595 = vsel %vm141, %v593, 0.0
    %v596 = vadd.f32 %v594, %v595
    %v597 = vrot.slane %v596, 4
    %v598 = vadd.f32 %v596, %v597
    %v599 = vrot.slane %v598, 2
    %v600 = vadd.f32 %v598, %v599
    %v601 = vrot.slane %v600, 1
    %v602 = vadd.f32 %v600, %v601
    %v603 = vld [vmem:[#allocation4] sm:$0x1]
    %605 = vset.pattern.permute.xlu0 0
    %606 = vperm.xlu0 %605, %v603
    %v607 = vpop.permute.xlu0 %606
    %v609 = vperm.slane %v607, 0
    %v610 = vadd.f32 %v602, %v609
    %v611 = vmul.f32 %v610, 0.5
    %v612 = vtanh.pop %v611
    %v613 = vadd.f32 %v612, 1.0
    %v614 = vmul.f32 %v613, 0.5
    %vm615 = vcmask 122880
    %616 = vst.msk [vmem:[#allocation5] sm:$0x1] %vm615, %v614
    // Predicated region
    $region54: #{tpu_custom_call.1} parent=1 // pred_check
      _
    $region55: #{tpu_custom_call.1} parent=1 // pred_check_branch
      %618 = sbr.rel (0) target = $region57
    $region56: #{tpu_custom_call.1} parent=1 // pred_region
      %620 = vsyncadd [#allocation6], 0
      %s622 = sshll.u32 [#allocation5], 4
      %s623 = int_to_ptr.vmem [resolvable:$true] %s622
      %s624 = sshll.u32 %s13, 4
      %s625 = int_to_ptr.hbm [resolvable:$true] %s624
      %627 = dma.vmem_to_hbm [thread:$0]  %s623, 16, %s625, [#allocation6]
    $region57: #{tpu_custom_call.1} parent=1 // pred_fallthru
      _
    // Predicated region
    $region58: #{tpu_custom_call.1} parent=1 // pred_check
      _
    $region59: #{tpu_custom_call.1} parent=1 // pred_check_branch
      %629 = sbr.rel (0) target = $region61
    $region60: #{tpu_custom_call.1} parent=1 // pred_region
      %631 = dma.done [#allocation6], 16
    $region61: #{tpu_custom_call.1} parent=1 // pred_fallthru
      _
    %632 = vsyncpa [#allocation6], 1

</llo_original>
